<compile_context>
chip_gen: v7x
topology: tpu7x:2x2x1
jax: 0.10.0
libtpu: 0.0.40
codegen_flags: <defaults>
</compile_context>

<pallas_src>
import math

import jax
import jax.numpy as jnp
from jax.experimental import pallas as pl
from jax.experimental.pallas import tpu as pltpu

_VMEM_LIMIT = 32 * 1024 * 1024      # modest raise over v5e's 16 MiB scoped default
_TILE_BYTES = 1 << 20               # ~1 MiB input tile: hides per-step grid overhead,
                                    # still double-buffers comfortably on every generation


# ------------------------------------------------------------------ helpers ---

def _round_up(v, m):
    return (v + m - 1) // m * m


def _pick_lanes(n):
    """Largest lane width (multiple of 128) dividing n -> no pad copy in the common case."""
    for lanes in (1024, 512, 256, 128):
        if n % lanes == 0:
            return lanes
    return 128


def _choose_block_rows(rows, lanes, itemsize):
    """~1 MiB tiles; block rows multiple of 32 (covers f32/bf16/int8 sublane tiling)."""
    target = max(32, (_TILE_BYTES // (lanes * max(1, itemsize))) // 32 * 32)
    return max(32, min(target, _round_up(rows, 32)))


def _to_2d_lanes(x):
    """Free reshape of the flattened tensor to (rows, lanes). Only pads (< 128 edge-valued
    elements, so min/max stays correct) when numel is not a multiple of 128."""
    flat = x.reshape(-1)
    n = flat.shape[0]
    lanes = _pick_lanes(n)
    padded = (n % lanes) != 0
    if padded:
        flat = jnp.pad(flat, (0, lanes - n % lanes), mode="edge")
    return flat.reshape(-1, lanes), n, padded


# ------------------------------------------------------------------ kernels ---

def _make_minmax_kernel(br, nb, half, rows, need_mask):
    """Observer hot path: VPU-only elementwise min/max accumulation into a block-shaped
    scratch; a single cross-lane reduction per grid half at the final step."""
    def kernel(x_ref, omin_ref, omax_ref, acc_min, acc_max):
        c = pl.program_id(0)          # 2-way split ("parallel"; shards across v7x cores)
        i = pl.program_id(1)          # running accumulation ("arbitrary")

        @pl.when(i == 0)
        def _():
            acc_min[...] = jnp.full_like(acc_min, jnp.inf)
            acc_max[...] = jnp.full_like(acc_max, -jnp.inf)

        blk = x_ref[...].astype(jnp.float32)
        if need_mask:
            bi = jnp.minimum(c * half + i, nb - 1)        # same clamp as the index_map
            grow = bi * br + jax.lax.broadcasted_iota(jnp.int32, blk.shape, 0)
            valid = grow < rows
            lo = jnp.where(valid, blk, jnp.inf)
            hi = jnp.where(valid, blk, -jnp.inf)
        else:
            lo = blk
            hi = blk
        acc_min[...] = jnp.minimum(acc_min[...], lo)      # pure VPU, hidden under DMA
        acc_max[...] = jnp.maximum(acc_max[...], hi)

        @pl.when(i == half - 1)                           # one XLU reduce per half
        def _():
            omin_ref[...] = jnp.full(omin_ref.shape, jnp.min(acc_min[...]), jnp.float32)
            omax_ref[...] = jnp.full(omax_ref.shape, jnp.max(acc_max[...]), jnp.float32)

    return kernel


def _make_fq_per_tensor_kernel(qmin, qmax):
    qmin_f, qmax_f = float(qmin), float(qmax)

    def kernel(p_ref, x_ref, o_ref):
        inv_s = p_ref[0]                                   # SMEM scalars
        s = p_ref[1]
        zp = p_ref[2]
        xf = x_ref[...].astype(jnp.float32)
        q = jnp.clip(jnp.round(xf * inv_s + zp), qmin_f, qmax_f)   # round-half-to-even
        o_ref[...] = ((q - zp) * s).astype(o_ref.dtype)
    return kernel


def _make_fq_per_channel_kernel(qmin, qmax):
    qmin_f, qmax_f = float(qmin), float(qmax)

    def kernel(scale_ref, zp_ref, x_ref, o_ref):
        s = scale_ref[...]                                 # (BC, 1) f32
        inv_s = 1.0 / s                                    # exact f32 reciprocal, tiny
        zp = zp_ref[...]                                   # (BC, 1) f32
        xf = x_ref[...].astype(jnp.float32)                # (1, BC, BS)
        q = jnp.clip(jnp.round(xf * inv_s[None] + zp[None]), qmin_f, qmax_f)
        o_ref[...] = ((q - zp[None]) * s[None]).astype(o_ref.dtype)
    return kernel


# ----------------------------------------------------------------- wrappers ---

def pallas_min_max_2d(x2):
    """Per-tensor min & max of a (rows, lanes) view via a Pallas reduction."""
    rows, lanes = x2.shape
    br = _choose_block_rows(rows, lanes, jnp.dtype(x2.dtype).itemsize)
    nb = pl.cdiv(rows, br)
    half = pl.cdiv(nb, 2)
    need_mask = (rows % br) != 0

    def x_index(c, i):
        # clamp: the (possibly empty) tail of the 2nd half re-reads the last valid block;
        # duplicates are harmless for min/max.
        return (jnp.minimum(c * half + i, nb - 1), 0)

    out_min, out_max = pl.pallas_call(
        _make_minmax_kernel(br, nb, half, rows, need_mask),
        out_shape=(jax.ShapeDtypeStruct((16, 128), jnp.float32),
                   jax.ShapeDtypeStruct((16, 128), jnp.float32)),
        grid=(2, half),
        in_specs=[pl.BlockSpec((br, lanes), x_index)],
        out_specs=(pl.BlockSpec((8, 128), lambda c, i: (c, 0)),
                   pl.BlockSpec((8, 128), lambda c, i: (c, 0))),
        scratch_shapes=[pltpu.VMEM((br, lanes), jnp.float32),
                        pltpu.VMEM((br, lanes), jnp.float32)],
        compiler_params=pltpu.CompilerParams(
            dimension_semantics=("parallel", "arbitrary"),
            vmem_limit_bytes=_VMEM_LIMIT),
    )(x2)
    return jnp.min(out_min), jnp.max(out_max)


def pallas_fake_quant_per_tensor_2d(x2, scale, zero_point, qmin, qmax):
    rows, lanes = x2.shape
    br = _choose_block_rows(rows, lanes, jnp.dtype(x2.dtype).itemsize)
    s = jnp.asarray(scale, jnp.float32).reshape(())
    zp = jnp.asarray(zero_point, jnp.float32).reshape(())
    params = jnp.stack([1.0 / s, s, zp])                    # [inv_scale, scale, zp] in SMEM

    return pl.pallas_call(
        _make_fq_per_tensor_kernel(qmin, qmax),
        out_shape=jax.ShapeDtypeStruct((rows, lanes), x2.dtype),
        grid=(pl.cdiv(rows, br),),
        in_specs=[pl.BlockSpec(memory_space=pltpu.MemorySpace.SMEM),
                  pl.BlockSpec((br, lanes), lambda i: (i, 0))],
        out_specs=pl.BlockSpec((br, lanes), lambda i: (i, 0)),
        compiler_params=pltpu.CompilerParams(
            dimension_semantics=("parallel",),
            vmem_limit_bytes=_VMEM_LIMIT),
    )(params, x2)


def pallas_min_max(x):
    x2, _, _ = _to_2d_lanes(x)
    return pallas_min_max_2d(x2)


def pallas_fake_quant_per_tensor(x, scale, zero_point, qmin, qmax):
    x2, n, padded = _to_2d_lanes(x)
    y2 = pallas_fake_quant_per_tensor_2d(x2, scale, zero_point, qmin, qmax)
    if padded:
        return y2.reshape(-1)[:n].reshape(x.shape)
    return y2.reshape(x.shape)


def pallas_fake_quant_per_channel(x, scale, zero_point, ch_axis, qmin, qmax):
    nd = x.ndim
    ax = ch_axis % nd
    shape = x.shape
    c = shape[ax]
    prefix = int(math.prod(shape[:ax]))
    suffix = int(math.prod(shape[ax + 1:]))
    x3 = x.reshape(prefix, c, suffix)                      # free reshape, no transpose

    itemsize = jnp.dtype(x.dtype).itemsize
    if suffix % 128 == 0:
        bs = min(suffix, 2048)                             # lane-dense, ragged tail OK
    else:
        bs = suffix                                        # must cover the full lane dim
    if c % 32 == 0:
        max_bc = max(32, ((2 << 20) // max(1, bs * itemsize)) // 32 * 32)
        bc = min(c, max_bc)
    else:
        bc = c                                             # must cover the full channel dim

    s_col = jnp.asarray(scale, jnp.float32).reshape(c, 1)
    z_col = jnp.asarray(zero_point, jnp.float32).reshape(c, 1)

    out = pl.pallas_call(
        _make_fq_per_channel_kernel(qmin, qmax),
        out_shape=jax.ShapeDtypeStruct((prefix, c, suffix), x.dtype),
        grid=(prefix, pl.cdiv(c, bc), pl.cdiv(suffix, bs)),
        in_specs=[pl.BlockSpec((bc, 1), lambda p, i, j: (i, 0)),
                  pl.BlockSpec((bc, 1), lambda p, i, j: (i, 0)),
                  pl.BlockSpec((1, bc, bs), lambda p, i, j: (p, i, j))],
        out_specs=pl.BlockSpec((1, bc, bs), lambda p, i, j: (p, i, j)),
        compiler_params=pltpu.CompilerParams(
            dimension_semantics=("parallel", "parallel", "parallel"),
            vmem_limit_bytes=_VMEM_LIMIT),
    )(s_col, z_col, x3)
    return out.reshape(shape)


# ------------------------------------------------------------------- module ---

class FixedFakeQuantize:
    """JAX/Pallas port of quant_transformer FixedFakeQuantize (MinMaxObserver)."""

    def __init__(self, bit=8, symmetric=False, ch_axis=-1):
        self.bit = bit
        self.symmetric = symmetric
        self.ch_axis = ch_axis
        if symmetric:
            self.quant_min = -(2 ** (bit - 1))
            self.quant_max = 2 ** (bit - 1) - 1
        else:
            self.quant_min = 0
            self.quant_max = 2 ** bit - 1
        self.observer_enabled = 0
        self.fake_quant_enabled = 0
        # buffers (matches register_buffer defaults in torch)
        self.scale = jnp.array([1.0], dtype=jnp.float32)
        self.zero_point = jnp.array([0], dtype=jnp.int32)
        # observer state
        self.min_val = jnp.array(jnp.inf, dtype=jnp.float32)
        self.max_val = jnp.array(-jnp.inf, dtype=jnp.float32)

    # -- flags -----------------------------------------------------------------
    def enable_observer(self):  self.observer_enabled = 1
    def disable_observer(self): self.observer_enabled = 0
    def enable_fake_quant(self):  self.fake_quant_enabled = 1
    def disable_fake_quant(self): self.fake_quant_enabled = 0

    # -- MinMaxObserver qparams --------------------------------------------------
    def calculate_qparams(self, min_val, max_val):
        eps = jnp.float32(jnp.finfo(jnp.float32).eps)
        min_val_neg = jnp.minimum(min_val, 0.0)
        max_val_pos = jnp.maximum(max_val, 0.0)
        if self.symmetric:
            max_val_pos = jnp.maximum(-min_val_neg, max_val_pos)
            scale = max_val_pos / (float(self.quant_max - self.quant_min) / 2.0)
            scale = jnp.maximum(scale, eps)
            zero_point = jnp.zeros_like(scale).astype(jnp.int32)
        else:
            scale = (max_val_pos - min_val_neg) / float(self.quant_max - self.quant_min)
            scale = jnp.maximum(scale, eps)
            zero_point = self.quant_min - jnp.round(min_val_neg / scale)
            zero_point = jnp.clip(zero_point, self.quant_min, self.quant_max).astype(jnp.int32)
        return scale, zero_point

    # -- forward -----------------------------------------------------------------
    def __call__(self, x, observation_mask=None, seq_pos=-1):
        # TODO(synk): observation_mask / seq_pos are accepted but unused by the base
        # MinMaxObserver; masked observation is not reproduced here.
        per_tensor = (self.ch_axis == -1)
        x2 = None
        n = 0
        padded = False
        if per_tensor and (self.observer_enabled == 1 or self.fake_quant_enabled == 1):
            x2, n, padded = _to_2d_lanes(x)            # single shared 2-D view, no copy

        if self.observer_enabled == 1:
            if per_tensor:
                mn, mx = pallas_min_max_2d(x2)                      # Pallas reduction
            else:
                ax = self.ch_axis % x.ndim
                axes = tuple(a for a in range(x.ndim) if a != ax)
                mn = jnp.min(x, axis=axes).astype(jnp.float32)      # glue (per-channel observer)
                mx = jnp.max(x, axis=axes).astype(jnp.float32)
            self.min_val = jnp.minimum(self.min_val, mn)
            self.max_val = jnp.maximum(self.max_val, mx)
            self.scale, self.zero_point = self.calculate_qparams(self.min_val, self.max_val)

        if self.fake_quant_enabled == 1:
            if per_tensor:
                y2 = pallas_fake_quant_per_tensor_2d(
                    x2, self.scale, self.zero_point, self.quant_min, self.quant_max)
                if padded:
                    x = y2.reshape(-1)[:n].reshape(x.shape)
                else:
                    x = y2.reshape(x.shape)
            else:
                x = pallas_fake_quant_per_channel(
                    x, self.scale, self.zero_point, self.ch_axis,
                    self.quant_min, self.quant_max)
        return x


# -------------------------------------------------------------------- main ----

def _ref_fq(x, scale, zp, qmin, qmax):
    scale = jnp.asarray(scale, jnp.float32)
    zp = jnp.asarray(zp, jnp.float32)
    inv = 1.0 / scale
    xf = x.astype(jnp.float32)
    q = jnp.clip(jnp.round(xf * inv + zp), qmin, qmax)
    return ((q - zp) * scale).astype(x.dtype)


if __name__ == "__main__":
    key = jax.random.PRNGKey(0)
    x = jax.random.normal(key, (2, 4, 16, 16), dtype=jnp.float32) * 3.0 + 0.5   # NCHW

    # --- per-tensor f32: observer + fake-quant, both in Pallas -------------------
    fq = FixedFakeQuantize(bit=8, symmetric=False, ch_axis=-1)
    fq.enable_observer()
    fq.enable_fake_quant()
    y = jax.block_until_ready(fq(x))

    mn_ref, mx_ref = jnp.min(x), jnp.max(x)
    assert jnp.allclose(fq.min_val, mn_ref, atol=1e-6)
    assert jnp.allclose(fq.max_val, mx_ref, atol=1e-6)
    s_ref, z_ref = fq.calculate_qparams(mn_ref, mx_ref)
    assert jnp.allclose(fq.scale, s_ref, rtol=1e-6)
    assert int(fq.zero_point) == int(z_ref)
    y_ref = _ref_fq(x, fq.scale, fq.zero_point, fq.quant_min, fq.quant_max)
    assert y.shape == x.shape and y.dtype == x.dtype
    assert jnp.allclose(y, y_ref, atol=1e-5, rtol=1e-5)

    # --- per-tensor bf16 (native-dtype HBM path), symmetric ----------------------
    xb = x.astype(jnp.bfloat16)
    fqb = FixedFakeQuantize(bit=8, symmetric=True, ch_axis=-1)
    fqb.enable_observer()
    fqb.enable_fake_quant()
    yb = jax.block_until_ready(fqb(xb))
    mnb = jnp.min(xb.astype(jnp.float32))
    mxb = jnp.max(xb.astype(jnp.float32))
    assert jnp.allclose(fqb.min_val, mnb, atol=1e-6)
    assert jnp.allclose(fqb.max_val, mxb, atol=1e-6)
    yb_ref = _ref_fq(xb, fqb.scale, fqb.zero_point, fqb.quant_min, fqb.quant_max)
    assert yb.shape == xb.shape and yb.dtype == jnp.bfloat16
    assert jnp.allclose(yb.astype(jnp.float32), yb_ref.astype(jnp.float32),
                        atol=1e-2, rtol=1e-2)

    # --- per-channel branch (ch_axis=1), fake-quant kernel with fixed qparams ----
    fq_ch = FixedFakeQuantize(bit=8, symmetric=False, ch_axis=1)
    fq_ch.scale = jnp.array([0.02, 0.03, 0.05, 0.01], dtype=jnp.float32)
    fq_ch.zero_point = jnp.array([128, 120, 100, 140], dtype=jnp.int32)
    fq_ch.enable_fake_quant()
    y_ch = jax.block_until_ready(fq_ch(x))
    y_ch_ref = _ref_fq(x, fq_ch.scale.reshape(1, 4, 1, 1),
                       fq_ch.zero_point.reshape(1, 4, 1, 1),
                       fq_ch.quant_min, fq_ch.quant_max)
    assert y_ch.shape == x.shape and y_ch.dtype == x.dtype
    assert jnp.allclose(y_ch, y_ch_ref, atol=1e-5, rtol=1e-5)

    print("KERNEL_OK")
</pallas_src>

<mosaic_0001>
module attributes {stable_mosaic.version = 11 : i64} {
  func.func @kernel(%arg0: i32, %arg1: i32, %arg2: memref<32x1024xf32, #tpu.memory_space<vmem>>, %arg3: memref<8x128xf32, #tpu.memory_space<vmem>>, %arg4: memref<8x128xf32, #tpu.memory_space<vmem>>, %arg5: memref<32x1024xf32, #tpu.memory_space<vmem>>, %arg6: memref<32x1024xf32, #tpu.memory_space<vmem>>) attributes {dimension_semantics = [#tpu.dimension_semantics<parallel>, #tpu.dimension_semantics<arbitrary>], iteration_bounds = array<i64: 2, 1>, scalar_prefetch = 0 : i64, scratch_operands = 2 : i64, tpu.core_type = #tpu.core_type<tc>, window_params = [{transform_indices = @transform_0, window_bounds = array<i64: 32, 1024>}, {transform_indices = @transform_1, window_bounds = array<i64: 8, 128>}, {transform_indices = @transform_2, window_bounds = array<i64: 8, 128>}]} {
    %c0_i32 = arith.constant 0 : i32
    %0 = arith.cmpi eq, %arg1, %c0_i32 : i32
    %1 = arith.extui %0 : i1 to i32
    %c0_i32_0 = arith.constant 0 : i32
    %2 = arith.cmpi ne, %1, %c0_i32_0 : i32
    scf.if %2 {
      %cst_14 = arith.constant 0x7F800000 : f32
      %26 = vector.broadcast %cst_14 : f32 to vector<32x1024xf32>
      %c0_15 = arith.constant 0 : index
      %c0_16 = arith.constant 0 : index
      %27 = vector.load %arg5[%c0_15, %c0_16] : memref<32x1024xf32, #tpu.memory_space<vmem>>, vector<32x1024xf32>
      tpu.vector_store %arg5[%c0_15, %c0_16], %26 {strides = array<i32>} : memref<32x1024xf32, #tpu.memory_space<vmem>>, vector<32x1024xf32>,
      %cst_17 = arith.constant 0xFF800000 : f32
      %28 = vector.broadcast %cst_17 : f32 to vector<32x1024xf32>
      %c0_18 = arith.constant 0 : index
      %c0_19 = arith.constant 0 : index
      %29 = vector.load %arg6[%c0_18, %c0_19] : memref<32x1024xf32, #tpu.memory_space<vmem>>, vector<32x1024xf32>
      tpu.vector_store %arg6[%c0_18, %c0_19], %28 {strides = array<i32>} : memref<32x1024xf32, #tpu.memory_space<vmem>>, vector<32x1024xf32>,
    } else {
    }
    %c0 = arith.constant 0 : index
    %c0_1 = arith.constant 0 : index
    %3 = vector.load %arg2[%c0, %c0_1] : memref<32x1024xf32, #tpu.memory_space<vmem>>, vector<32x1024xf32>
    %c1_i32 = arith.constant 1 : i32
    %4 = arith.muli %arg0, %c1_i32 : i32
    %5 = arith.addi %4, %arg1 : i32
    %c0_i32_2 = arith.constant 0 : i32
    %6 = arith.minsi %5, %c0_i32_2 : i32
    %c32_i32 = arith.constant 32 : i32
    %7 = arith.muli %6, %c32_i32 : i32
    %8 = tpu.iota {dimensions = array<i32: 0>} : vector<32x1024xi32>
    %9 = vector.broadcast %7 : i32 to vector<32x1024xi32>
    %10 = arith.addi %9, %8 : vector<32x1024xi32>
    %c2_i32 = arith.constant 2 : i32
    %11 = vector.broadcast %c2_i32 : i32 to vector<32x1024xi32>
    %12 = arith.cmpi slt, %10, %11 : vector<32x1024xi32>
    %cst = arith.constant 0x7F800000 : f32
    %13 = vector.broadcast %cst : f32 to vector<32x1024xf32>
    %14 = arith.select %12, %3, %13 : vector<32x1024xi1>, vector<32x1024xf32>
    %cst_3 = arith.constant 0xFF800000 : f32
    %15 = vector.broadcast %cst_3 : f32 to vector<32x1024xf32>
    %16 = arith.select %12, %3, %15 : vector<32x1024xi1>, vector<32x1024xf32>
    %c0_4 = arith.constant 0 : index
    %c0_5 = arith.constant 0 : index
    %17 = vector.load %arg5[%c0_4, %c0_5] : memref<32x1024xf32, #tpu.memory_space<vmem>>, vector<32x1024xf32>
    %18 = arith.minimumf %17, %14 : vector<32x1024xf32>
    %c0_6 = arith.constant 0 : index
    %c0_7 = arith.constant 0 : index
    %19 = vector.load %arg5[%c0_6, %c0_7] : memref<32x1024xf32, #tpu.memory_space<vmem>>, vector<32x1024xf32>
    tpu.vector_store %arg5[%c0_6, %c0_7], %18 {strides = array<i32>} : memref<32x1024xf32, #tpu.memory_space<vmem>>, vector<32x1024xf32>,
    %c0_8 = arith.constant 0 : index
    %c0_9 = arith.constant 0 : index
    %20 = vector.load %arg6[%c0_8, %c0_9] : memref<32x1024xf32, #tpu.memory_space<vmem>>, vector<32x1024xf32>
    %21 = arith.maximumf %20, %16 : vector<32x1024xf32>
    %c0_10 = arith.constant 0 : index
    %c0_11 = arith.constant 0 : index
    %22 = vector.load %arg6[%c0_10, %c0_11] : memref<32x1024xf32, #tpu.memory_space<vmem>>, vector<32x1024xf32>
    tpu.vector_store %arg6[%c0_10, %c0_11], %21 {strides = array<i32>} : memref<32x1024xf32, #tpu.memory_space<vmem>>, vector<32x1024xf32>,
    %c0_i32_12 = arith.constant 0 : i32
    %23 = arith.cmpi eq, %arg1, %c0_i32_12 : i32
    %24 = arith.extui %23 : i1 to i32
    %c0_i32_13 = arith.constant 0 : i32
    %25 = arith.cmpi ne, %24, %c0_i32_13 : i32
    scf.if %25 {
      %c0_14 = arith.constant 0 : index
      %c0_15 = arith.constant 0 : index
      %26 = vector.load %arg5[%c0_14, %c0_15] : memref<32x1024xf32, #tpu.memory_space<vmem>>, vector<32x1024xf32>
      %27 = vector.shape_cast %26 : vector<32x1024xf32> to vector<1x32x1024xf32>
      %cst_16 = arith.constant dense<0x7F800000> : vector<1xf32>
      %28 = vector.multi_reduction <minimumf>, %27, %cst_16 [1, 2] : vector<1x32x1024xf32> to vector<1xf32>
      %29 = vector.shape_cast %28 : vector<1xf32> to vector<1x1x1xf32>
      %30 = vector.extract %29[0, 0, 0] : f32 from vector<1x1x1xf32>
      %31 = vector.broadcast %30 : f32 to vector<8x128xf32>
      %c0_17 = arith.constant 0 : index
      %c0_18 = arith.constant 0 : index
      %32 = vector.load %arg3[%c0_17, %c0_18] : memref<8x128xf32, #tpu.memory_space<vmem>>, vector<8x128xf32>
      tpu.vector_store %arg3[%c0_17, %c0_18], %31 {strides = array<i32>} : memref<8x128xf32, #tpu.memory_space<vmem>>, vector<8x128xf32>,
      %c0_19 = arith.constant 0 : index
      %c0_20 = arith.constant 0 : index
      %33 = vector.load %arg6[%c0_19, %c0_20] : memref<32x1024xf32, #tpu.memory_space<vmem>>, vector<32x1024xf32>
      %34 = vector.shape_cast %33 : vector<32x1024xf32> to vector<1x32x1024xf32>
      %cst_21 = arith.constant dense<0xFF800000> : vector<1xf32>
      %35 = vector.multi_reduction <maximumf>, %34, %cst_21 [1, 2] : vector<1x32x1024xf32> to vector<1xf32>
      %36 = vector.shape_cast %35 : vector<1xf32> to vector<1x1x1xf32>
      %37 = vector.extract %36[0, 0, 0] : f32 from vector<1x1x1xf32>
      %38 = vector.broadcast %37 : f32 to vector<8x128xf32>
      %c0_22 = arith.constant 0 : index
      %c0_23 = arith.constant 0 : index
      %39 = vector.load %arg4[%c0_22, %c0_23] : memref<8x128xf32, #tpu.memory_space<vmem>>, vector<8x128xf32>
      tpu.vector_store %arg4[%c0_22, %c0_23], %38 {strides = array<i32>} : memref<8x128xf32, #tpu.memory_space<vmem>>, vector<8x128xf32>,
    } else {
    }
    return
  }
  func.func @transform_0(%arg0: i32, %arg1: i32) -> (i32, i32) {
    %c1_i32 = arith.constant 1 : i32
    %0 = arith.muli %arg0, %c1_i32 : i32
    %1 = arith.addi %0, %arg1 : i32
    %c0_i32 = arith.constant 0 : i32
    %2 = arith.minsi %1, %c0_i32 : i32
    %c0_i32_0 = arith.constant 0 : i32
    %c0_i32_1 = arith.constant 0 : i32
    return %2, %c0_i32_0 : i32, i32
  }
  func.func @transform_1(%arg0: i32, %arg1: i32) -> (i32, i32) {
    %c0_i32 = arith.constant 0 : i32
    %c0_i32_0 = arith.constant 0 : i32
    return %arg0, %c0_i32 : i32, i32
  }
  func.func @transform_2(%arg0: i32, %arg1: i32) -> (i32, i32) {
    %c0_i32 = arith.constant 0 : i32
    %c0_i32_0 = arith.constant 0 : i32
    return %arg0, %c0_i32 : i32, i32
  }
}

</mosaic_0001>

<llo_original>
// kernel: tpu_custom_call.1
$region0: #{tpu_custom_call.1}
  #allocation0 [shape = 'u32[]', space=smem, size = 0x4, offset = 0x4, fixed_abs, tag = 'smem constant byte address 0x4 - core index']
  #allocation1 [shape = 'u32[144,128]{1,0:T(1,128)}', space=vmem, size = 0x12000, scoped, tag = 'internal scratch']
  #allocation2 [shape = 'f32[32,1024]{1,0:T(8,128)}', space=vmem, size = 0x20000, scoped, tag = 'scratch operand']
  #allocation3 [shape = 'f32[32,1024]{1,0:T(8,128)}', space=vmem, size = 0x20000, scoped, tag = 'scratch operand']
  %s0 = inlined_call_operand.hbm [shape: f32[2,1024], index: 0, kind: input, shape index: {}]
  %s1 = inlined_call_operand.hbm [shape: f32[16,128], index: 1, kind: output, shape index: {0}]
  %s2 = inlined_call_operand.hbm [shape: f32[16,128], index: 2, kind: output, shape index: {1}]
  %3 = xla_tuple %s1, %s2
  %s4 = sld [smem:[#allocation0]]
  $region57: #{tpu_custom_call.1} parent=0
    _
  %s6 = ssub.s32 1, %s4
  %s7 = scalar_select 0, %s6, %s4
  $region1: #{tpu_custom_call.1} parent=0
    #allocation4 [shape = 'u8[262144]{0}', space=vmem, size = 0x40000, scoped, tag = 'input window, operand 0']
    #allocation5 [shape = 's32[2]{0}', space=sflag, size = 0x8, scoped, tag = 'scoped memory for tpu_custom_call.1']
    #allocation6 [shape = 's32[2]{0}', space=sflag, size = 0x8, scoped, tag = 'scoped memory for tpu_custom_call.1']
    #allocation7 [shape = 'u8[8192]{0}', space=vmem, size = 0x2000, scoped, tag = 'output window, operand 0']
    #allocation8 [shape = 'u8[8192]{0}', space=vmem, size = 0x2000, scoped, tag = 'output window, operand 1']
    #allocation9 [shape = 's32[2]{0}', space=sflag, size = 0x8, scoped, tag = 'scoped memory for tpu_custom_call.1']
    %8 = vsyncpa [#allocation5], 0
    %s9 = scalar_lea.sflag [#allocation5], 1
    %10 = vsyncpa %s9, 0
    %11 = vsyncpa [#allocation6], 0
    %s12 = scalar_lea.sflag [#allocation6], 1
    %13 = vsyncpa %s12, 0
    %14 = vsyncpa [#allocation9], 0
    %s15 = scalar_lea.sflag [#allocation9], 1
    %16 = vsyncpa %s15, 0
    loop: start=0, step=1, limit=4
    $region2: #{tpu_custom_call.1} parent=1 // loop_pre_header
      _
    $region3: #{tpu_custom_call.1} parent=1 // loop_header
      %s18 = sphi 0, %s22
      %p19 = scmp.ge.s32.totalorder %s18, 4
      %s25 = sphi 0, %s37
      %s26 = sphi 0, %s33
      %s27 = sphi 0, %s25
      %s28 = sphi 0, %s26
      %s29 = sphi 0, %s27
      %s30 = sphi 0, %s28
      %s46 = sphi 0, %s48
      %s49 = sphi 0, %s46
      %s50 = sphi 0, %s49
      %s66 = sphi 0, %s50
      %s72 = sphi 0, %s74
      %s75 = sphi 0, %s72
      %s76 = sphi 0, %s75
      %s92 = sphi 0, %s76
      %s98 = sphi 0, %s100
      %s101 = sphi 0, %s98
      %s102 = sphi 0, %s101
      %s118 = sphi 0, %s102
    $region4: #{tpu_custom_call.1} parent=1 // loop_header_branch
      %21 = sbr.rel (%p19) target = $region8
    $region5: #{tpu_custom_call.1} parent=1 // loop_body
      %s23 = ssub.s32 %s18, 1
      %s24 = ssub.s32 %s18, 2
      %s31 = sadd.s32 1, %s26
      %p32 = scmp.ge.s32.totalorder %s31, 1
      %s33 = scalar_select %p32, 0, %s31
      %s34 = sadd.s32 1, %s25
      %s35 = scalar_select %p32, %s34, %s25
      %p36 = scmp.ge.s32.totalorder %s35, 2
      %s37 = scalar_select %p36, 0, %s35
      %s38 = sadd.s32 %s25, %s26
      %p39 = scmp.lt.s32.totalorder %s38, 0
      %s40 = scalar_select %p39, %s38, 0
      %s41 = sadd.s32 %s37, %s33
      %p42 = scmp.lt.s32.totalorder %s41, 0
      %s43 = scalar_select %p42, %s41, 0
      %s44 = ssub.s32 %s40, %s43
      %p45 = scmp.eq.s32.totalorder %s44, 0
      %s47 = sadd.s32 %s46, 1
      %s48 = scalar_select %p45, %s46, %s47
      %p51 = pneg %p45
      %p52 = scmp.eq.s32.totalorder %s18, 1
      %p53 = por %p51, %p52
      %p54 = scmp.ne.s32.totalorder %s46, %s49
      %p55 = scmp.eq.s32.totalorder %s18, 0
      %p56 = por %p54, %p55
      %p57 = scmp.ne.s32.totalorder %s46, %s49
      %p58 = scmp.eq.s32.totalorder %s23, 1
      %p59 = por %p57, %p58
      %p60 = scmp.ne.s32.totalorder %s49, %s50
      %p61 = scmp.eq.s32.totalorder %s23, 0
      %p62 = por %p60, %p61
      %p63 = scmp.ne.s32.totalorder %s49, %s50
      %p64 = scmp.eq.s32.totalorder %s24, 1
      %p65 = por %p63, %p64
      %p67 = scmp.ne.s32.totalorder %s50, %s66
      %p68 = scmp.eq.s32.totalorder %s24, 0
      %p69 = por %p67, %p68
      %s70 = ssub.s32 %s25, %s37
      %p71 = scmp.eq.s32.totalorder %s70, 0
      %s73 = sadd.s32 %s72, 1
      %s74 = scalar_select %p71, %s72, %s73
      %p77 = pneg %p71
      %p78 = scmp.eq.s32.totalorder %s18, 1
      %p79 = por %p77, %p78
      %p80 = scmp.ne.s32.totalorder %s72, %s75
      %p81 = scmp.eq.s32.totalorder %s18, 0
      %p82 = por %p80, %p81
      %p83 = scmp.ne.s32.totalorder %s72, %s75
      %p84 = scmp.eq.s32.totalorder %s23, 1
      %p85 = por %p83, %p84
      %p86 = scmp.ne.s32.totalorder %s75, %s76
      %p87 = scmp.eq.s32.totalorder %s23, 0
      %p88 = por %p86, %p87
      %p89 = scmp.ne.s32.totalorder %s75, %s76
      %p90 = scmp.eq.s32.totalorder %s24, 1
      %p91 = por %p89, %p90
      %p93 = scmp.ne.s32.totalorder %s76, %s92
      %p94 = scmp.eq.s32.totalorder %s24, 0
      %p95 = por %p93, %p94
      %s96 = ssub.s32 %s25, %s37
      %p97 = scmp.eq.s32.totalorder %s96, 0
      %s99 = sadd.s32 %s98, 1
      %s100 = scalar_select %p97, %s98, %s99
      %p103 = pneg %p97
      %p104 = scmp.eq.s32.totalorder %s18, 1
      %p105 = por %p103, %p104
      %p106 = scmp.ne.s32.totalorder %s98, %s101
      %p107 = scmp.eq.s32.totalorder %s18, 0
      %p108 = por %p106, %p107
      %p109 = scmp.ne.s32.totalorder %s98, %s101
      %p110 = scmp.eq.s32.totalorder %s23, 1
      %p111 = por %p109, %p110
      %p112 = scmp.ne.s32.totalorder %s101, %s102
      %p113 = scmp.eq.s32.totalorder %s23, 0
      %p114 = por %p112, %p113
      %p115 = scmp.ne.s32.totalorder %s101, %s102
      %p116 = scmp.eq.s32.totalorder %s24, 1
      %p117 = por %p115, %p116
      %p119 = scmp.ne.s32.totalorder %s102, %s118
      %p120 = scmp.eq.s32.totalorder %s24, 0
      %p121 = por %p119, %p120
      %p122 = scmp.le.s32.totalorder 1, %s18
      %p123 = scmp.lt.s32.totalorder %s18, 3
      %p124 = pnand %p122, %p123
      %p125 = pneg %p124
      // Predicated region
      $region9: #{tpu_custom_call.1} parent=5 // pred_check
        _
      $region10: #{tpu_custom_call.1} parent=5 // pred_check_branch
        %127 = sbr.rel (%p124) target = $region12
      $region11: #{tpu_custom_call.1} parent=5 // pred_region
        %s128 = ssub.s32 %s18, 1
      $region12: #{tpu_custom_call.1} parent=5 // pred_fallthru
        _
      %p129 = scmp.lt.s32.totalorder %s18, 2
      // Predicated region
      $region13: #{tpu_custom_call.1} parent=5 // pred_check
        %p130 = pneg %p129
      $region14: #{tpu_custom_call.1} parent=5 // pred_check_branch
        %132 = sbr.rel (%p130) target = $region16
      $region15: #{tpu_custom_call.1} parent=5 // pred_region
        // Predicated region
        $region17: #{tpu_custom_call.1} parent=15 // pred_check
          %p133 = pneg %p56
        $region18: #{tpu_custom_call.1} parent=15 // pred_check_branch
          %135 = sbr.rel (%p133) target = $region20
        $region19: #{tpu_custom_call.1} parent=15 // pred_region
          %s136 = sand.u32 %s46, 1
          %s137 = scalar_lea.sflag [#allocation5], %s136
          %s138 = sand.u32 %s46, 1
          %s139 = smul.addr %s138, 256
          %s140 = scalar_lea.vmem [#allocation4], %s139
          %s141 = sadd.s32 %s25, %s26
          %p142 = scmp.lt.s32.totalorder %s141, 0
          %s143 = scalar_select %p142, %s141, 0
          %s144 = smul.u32 16, %s143
          %s145 = ssub.s32 1, %s144
          %s146 = smul.u32 32, %s145
          %s147 = smul.u32 %s146, 8
          %s149 = ssub.s32 4096, %s147
          %150 = vsyncadd %s137, %s149
          %p151 = scmp.ne.s32.totalorder 0, %s147
          %s152 = smul.addr %s144, 8
          %s153 = smul.addr %s152, 32
          %s154 = scalar_lea.hbm %s0, %s153
          %s155 = smul.u32 16, %s145
          %s156 = sshll.u32 %s140, 4
          %s157 = int_to_ptr.vmem [resolvable:$true] %s156
          %s158 = sshll.u32 %s155, 4
          %162 = dma.hbm_to_vmem [thread:$0]  (%p151), %s154, %s158, %s157, %s137, 256, 256, 16
        $region20: #{tpu_custom_call.1} parent=15 // pred_fallthru
          _
      $region16: #{tpu_custom_call.1} parent=5 // pred_fallthru
        _
      %p163 = scmp.le.s32.totalorder 1, %s18
      %p164 = scmp.lt.s32.totalorder %s18, 3
      %p165 = pnand %p163, %p164
      %p166 = pneg %p165
      // Predicated region
      $region21: #{tpu_custom_call.1} parent=5 // pred_check
        _
      $region22: #{tpu_custom_call.1} parent=5 // pred_check_branch
        %168 = sbr.rel (%p165) target = $region24
      $region23: #{tpu_custom_call.1} parent=5 // pred_region
        %s169 = ssub.s32 %s18, 1
        %s170 = sand.u32 %s49, 1
        %s171 = scalar_lea.sflag [#allocation5], %s170
        %s172 = sand.u32 %s49, 1
        %s173 = smul.addr %s172, 256
        %s174 = scalar_lea.vmem [#allocation4], %s173
        // Predicated region
        $region25: #{tpu_custom_call.1} parent=23 // pred_check
          %p175 = pneg %p62
        $region26: #{tpu_custom_call.1} parent=23 // pred_check_branch
          %177 = sbr.rel (%p175) target = $region28
        $region27: #{tpu_custom_call.1} parent=23 // pred_region
          %178 = dma.done %s171, 4096
        $region28: #{tpu_custom_call.1} parent=23 // pred_fallthru
          _
        %s179 = sand.u32 %s49, 1
        %s180 = scalar_lea.sflag [#allocation5], %s179
        %s181 = sand.u32 %s49, 1
        %s182 = smul.addr %s181, 256
        %s183 = scalar_lea.vmem [#allocation4], %s182
        %p184 = pneg %p62
        %p185 = pneg %p59
        %p186 = pneg %p88
        %p187 = pneg %p85
        %s188 = sand.u32 %s75, 1
        %s189 = scalar_lea.sflag [#allocation6], %s188
        %s190 = sand.u32 %s75, 1
        %s191 = smul.addr %s190, 8
        %s192 = scalar_lea.vmem [#allocation7], %s191
        %p193 = pneg %p114
        %p194 = pneg %p111
        %s195 = sand.u32 %s101, 1
        %s196 = scalar_lea.sflag [#allocation9], %s195
        %s197 = sand.u32 %s101, 1
        %s198 = smul.addr %s197, 8
        %s199 = scalar_lea.vmem [#allocation8], %s198
        %s200 = sadd.s32 %s27, %s28
        %p201 = scmp.lt.s32.totalorder %s200, 0
        %s202 = scalar_select %p201, %s200, 0
        %s203 = smul.u32 16, %s202
        %s204 = ssub.s32 1, %s203
        %s205 = smul.u32 32, %s204
        %s206 = smul.u32 %s205, 8
        %p207 = scmp.eq.s32.totalorder %s28, 0
        // Predicated region
        $region29: #{tpu_custom_call.1} parent=23 // pred_check
          %p208 = pneg %p207
        $region30: #{tpu_custom_call.1} parent=23 // pred_check_branch
          %210 = sbr.rel (%p208) target = $region32
        $region31: #{tpu_custom_call.1} parent=23 // pred_region
          %211 = vst [vmem:[#allocation2] sm:$0xff] inf
          %212 = vst [vmem:[#allocation2 + $0x8] sm:$0xff] inf
          %213 = vst [vmem:[#allocation2 + $0x10] sm:$0xff] inf
          %214 = vst [vmem:[#allocation2 + $0x18] sm:$0xff] inf
          %215 = vst [vmem:[#allocation2 + $0x20] sm:$0xff] inf
          %216 = vst [vmem:[#allocation2 + $0x28] sm:$0xff] inf
          %217 = vst [vmem:[#allocation2 + $0x30] sm:$0xff] inf
          %218 = vst [vmem:[#allocation2 + $0x38] sm:$0xff] inf
          %219 = vst [vmem:[#allocation2 + $0x40] sm:$0xff] inf
          %220 = vst [vmem:[#allocation2 + $0x48] sm:$0xff] inf
          %221 = vst [vmem:[#allocation2 + $0x50] sm:$0xff] inf
          %222 = vst [vmem:[#allocation2 + $0x58] sm:$0xff] inf
          %223 = vst [vmem:[#allocation2 + $0x60] sm:$0xff] inf
          %224 = vst [vmem:[#allocation2 + $0x68] sm:$0xff] inf
          %225 = vst [vmem:[#allocation2 + $0x70] sm:$0xff] inf
          %226 = vst [vmem:[#allocation2 + $0x78] sm:$0xff] inf
          %227 = vst [vmem:[#allocation2 + $0x80] sm:$0xff] inf
          %228 = vst [vmem:[#allocation2 + $0x88] sm:$0xff] inf
          %229 = vst [vmem:[#allocation2 + $0x90] sm:$0xff] inf
          %230 = vst [vmem:[#allocation2 + $0x98] sm:$0xff] inf
          %231 = vst [vmem:[#allocation2 + $0xa0] sm:$0xff] inf
          %232 = vst [vmem:[#allocation2 + $0xa8] sm:$0xff] inf
          %233 = vst [vmem:[#allocation2 + $0xb0] sm:$0xff] inf
          %234 = vst [vmem:[#allocation2 + $0xb8] sm:$0xff] inf
          %235 = vst [vmem:[#allocation2 + $0xc0] sm:$0xff] inf
          %236 = vst [vmem:[#allocation2 + $0xc8] sm:$0xff] inf
          %237 = vst [vmem:[#allocation2 + $0xd0] sm:$0xff] inf
          %238 = vst [vmem:[#allocation2 + $0xd8] sm:$0xff] inf
          %239 = vst [vmem:[#allocation2 + $0xe0] sm:$0xff] inf
          %240 = vst [vmem:[#allocation2 + $0xe8] sm:$0xff] inf
          %241 = vst [vmem:[#allocation2 + $0xf0] sm:$0xff] inf
          %242 = vst [vmem:[#allocation2 + $0xf8] sm:$0xff] inf
          %243 = vst [vmem:[#allocation3] sm:$0xff] -inf
          %244 = vst [vmem:[#allocation3 + $0x8] sm:$0xff] -inf
          %245 = vst [vmem:[#allocation3 + $0x10] sm:$0xff] -inf
          %246 = vst [vmem:[#allocation3 + $0x18] sm:$0xff] -inf
          %247 = vst [vmem:[#allocation3 + $0x20] sm:$0xff] -inf
          %248 = vst [vmem:[#allocation3 + $0x28] sm:$0xff] -inf
          %249 = vst [vmem:[#allocation3 + $0x30] sm:$0xff] -inf
          %250 = vst [vmem:[#allocation3 + $0x38] sm:$0xff] -inf
          %251 = vst [vmem:[#allocation3 + $0x40] sm:$0xff] -inf
          %252 = vst [vmem:[#allocation3 + $0x48] sm:$0xff] -inf
          %253 = vst [vmem:[#allocation3 + $0x50] sm:$0xff] -inf
          %254 = vst [vmem:[#allocation3 + $0x58] sm:$0xff] -inf
          %255 = vst [vmem:[#allocation3 + $0x60] sm:$0xff] -inf
          %256 = vst [vmem:[#allocation3 + $0x68] sm:$0xff] -inf
          %257 = vst [vmem:[#allocation3 + $0x70] sm:$0xff] -inf
          %258 = vst [vmem:[#allocation3 + $0x78] sm:$0xff] -inf
          %259 = vst [vmem:[#allocation3 + $0x80] sm:$0xff] -inf
          %260 = vst [vmem:[#allocation3 + $0x88] sm:$0xff] -inf
          %261 = vst [vmem:[#allocation3 + $0x90] sm:$0xff] -inf
          %262 = vst [vmem:[#allocation3 + $0x98] sm:$0xff] -inf
          %263 = vst [vmem:[#allocation3 + $0xa0] sm:$0xff] -inf
          %264 = vst [vmem:[#allocation3 + $0xa8] sm:$0xff] -inf
          %265 = vst [vmem:[#allocation3 + $0xb0] sm:$0xff] -inf
          %266 = vst [vmem:[#allocation3 + $0xb8] sm:$0xff] -inf
          %267 = vst [vmem:[#allocation3 + $0xc0] sm:$0xff] -inf
          %268 = vst [vmem:[#allocation3 + $0xc8] sm:$0xff] -inf
          %269 = vst [vmem:[#allocation3 + $0xd0] sm:$0xff] -inf
          %270 = vst [vmem:[#allocation3 + $0xd8] sm:$0xff] -inf
          %271 = vst [vmem:[#allocation3 + $0xe0] sm:$0xff] -inf
          %272 = vst [vmem:[#allocation3 + $0xe8] sm:$0xff] -inf
          %273 = vst [vmem:[#allocation3 + $0xf0] sm:$0xff] -inf
          %274 = vst [vmem:[#allocation3 + $0xf8] sm:$0xff] -inf
        $region32: #{tpu_custom_call.1} parent=23 // pred_fallthru
          _
        %v275 = vld [vmem:[%s174] sm:$0xff]
        %v276 = vld [vmem:[%s174 + $0x8] sm:$0xff]
        %v277 = vld [vmem:[%s174 + $0x10] sm:$0xff]
        %v278 = vld [vmem:[%s174 + $0x18] sm:$0xff]
        %v279 = vld [vmem:[%s174 + $0x20] sm:$0xff]
        %v280 = vld [vmem:[%s174 + $0x28] sm:$0xff]
        %v281 = vld [vmem:[%s174 + $0x30] sm:$0xff]
        %v282 = vld [vmem:[%s174 + $0x38] sm:$0xff]
        %v283 = vld [vmem:[%s174 + $0x40] sm:$0xff]
        %v284 = vld [vmem:[%s174 + $0x48] sm:$0xff]
        %v285 = vld [vmem:[%s174 + $0x50] sm:$0xff]
        %v286 = vld [vmem:[%s174 + $0x58] sm:$0xff]
        %v287 = vld [vmem:[%s174 + $0x60] sm:$0xff]
        %v288 = vld [vmem:[%s174 + $0x68] sm:$0xff]
        %v289 = vld [vmem:[%s174 + $0x70] sm:$0xff]
        %v290 = vld [vmem:[%s174 + $0x78] sm:$0xff]
        %v291 = vld [vmem:[%s174 + $0x80] sm:$0xff]
        %v292 = vld [vmem:[%s174 + $0x88] sm:$0xff]
        %v293 = vld [vmem:[%s174 + $0x90] sm:$0xff]
        %v294 = vld [vmem:[%s174 + $0x98] sm:$0xff]
        %v295 = vld [vmem:[%s174 + $0xa0] sm:$0xff]
        %v296 = vld [vmem:[%s174 + $0xa8] sm:$0xff]
        %v297 = vld [vmem:[%s174 + $0xb0] sm:$0xff]
        %v298 = vld [vmem:[%s174 + $0xb8] sm:$0xff]
        %v299 = vld [vmem:[%s174 + $0xc0] sm:$0xff]
        %v300 = vld [vmem:[%s174 + $0xc8] sm:$0xff]
        %v301 = vld [vmem:[%s174 + $0xd0] sm:$0xff]
        %v302 = vld [vmem:[%s174 + $0xd8] sm:$0xff]
        %v303 = vld [vmem:[%s174 + $0xe0] sm:$0xff]
        %v304 = vld [vmem:[%s174 + $0xe8] sm:$0xff]
        %v305 = vld [vmem:[%s174 + $0xf0] sm:$0xff]
        %v306 = vld [vmem:[%s174 + $0xf8] sm:$0xff]
        %s307 = sadd.s32 %s27, %s28
        %p308 = scmp.lt.s32.totalorder %s307, 0
        %s309 = scalar_select %p308, %s307, 0
        %s310 = smul.u32 %s309, 32
        %v311 = vlaneseq
        %v312 = vshrl.u32 %v311, 7
        %v313 = vadd.s32 %v312, 8
        %v314 = vadd.s32 %v312, 16
        %v315 = vadd.s32 %v312, 24
        %v316 = vstv %s310
        %v317 = vadd.s32 %v316, %v312
        %v318 = vadd.s32 %v316, %v313
        %v319 = vadd.s32 %v316, %v314
        %v320 = vadd.s32 %v316, %v315
        %vm321 = vcmp.lt.s32.totalorder %v317, 2
        %vm322 = vcmp.lt.s32.totalorder %v318, 2
        %vm323 = vcmp.lt.s32.totalorder %v319, 2
        %vm324 = vcmp.lt.s32.totalorder %v320, 2
        %v357 = vcombine.low %v275, %v277
        %v358 = vcombine.high %v275, %v277
        %v359 = vcombine.low %v279, %v281
        %v360 = vcombine.high %v279, %v281
        %v362 = vunpack.c.l.s4 1983009808
        %v363 = vunpack.c.0.s8 %v362
        %v364 = vlaneseq
        %v365 = vshrl.u32 %v364, 7
        %v366 = vsub.s32 %v363, %v365
        %v367 = vrot.slane %v357, %v366
        %v369 = vunpack.c.l.s4 1983009808
        %v370 = vunpack.c.0.s8 %v369
        %v371 = vlaneseq
        %v372 = vshrl.u32 %v371, 7
        %v373 = vsub.s32 %v370, %v372
        %v374 = vrot.slane %v358, %v373
        %v376 = vunpack.c.l.s4 1983009808
        %v377 = vunpack.c.0.s8 %v376
        %v378 = vlaneseq
        %v379 = vshrl.u32 %v378, 7
        %v380 = vsub.s32 %v377, %v379
        %v381 = vrot.slane %v359, %v380
        %v383 = vunpack.c.l.s4 1983009808
        %v384 = vunpack.c.0.s8 %v383
        %v385 = vlaneseq
        %v386 = vshrl.u32 %v385, 7
        %v387 = vsub.s32 %v384, %v386
        %v388 = vrot.slane %v360, %v387
        %v389 = vcombine.low %v367, %v381
        %v390 = vcombine.high %v367, %v381
        %v391 = vcombine.low %v374, %v388
        %v392 = vcombine.high %v374, %v388
        %v393 = vcombine.low %v276, %v278
        %v394 = vcombine.high %v276, %v278
        %v395 = vcombine.low %v280, %v282
        %v396 = vcombine.high %v280, %v282
        %v398 = vunpack.c.l.s4 1983009808
        %v399 = vunpack.c.0.s8 %v398
        %v400 = vlaneseq
        %v401 = vshrl.u32 %v400, 7
        %v402 = vsub.s32 %v399, %v401
        %v403 = vrot.slane %v393, %v402
        %v405 = vunpack.c.l.s4 1983009808
        %v406 = vunpack.c.0.s8 %v405
        %v407 = vlaneseq
        %v408 = vshrl.u32 %v407, 7
        %v409 = vsub.s32 %v406, %v408
        %v410 = vrot.slane %v394, %v409
        %v412 = vunpack.c.l.s4 1983009808
        %v413 = vunpack.c.0.s8 %v412
        %v414 = vlaneseq
        %v415 = vshrl.u32 %v414, 7
        %v416 = vsub.s32 %v413, %v415
        %v417 = vrot.slane %v395, %v416
        %v419 = vunpack.c.l.s4 1983009808
        %v420 = vunpack.c.0.s8 %v419
        %v421 = vlaneseq
        %v422 = vshrl.u32 %v421, 7
        %v423 = vsub.s32 %v420, %v422
        %v424 = vrot.slane %v396, %v423
        %v425 = vcombine.low %v403, %v417
        %v426 = vcombine.high %v403, %v417
        %v427 = vcombine.low %v410, %v424
        %v428 = vcombine.high %v410, %v424
        %v429 = vcombine.low %v283, %v285
        %v430 = vcombine.high %v283, %v285
        %v431 = vcombine.low %v287, %v289
        %v432 = vcombine.high %v287, %v289
        %v434 = vunpack.c.l.s4 1983009808
        %v435 = vunpack.c.0.s8 %v434
        %v436 = vlaneseq
        %v437 = vshrl.u32 %v436, 7
        %v438 = vsub.s32 %v435, %v437
        %v439 = vrot.slane %v429, %v438
        %v441 = vunpack.c.l.s4 1983009808
        %v442 = vunpack.c.0.s8 %v441
        %v443 = vlaneseq
        %v444 = vshrl.u32 %v443, 7
        %v445 = vsub.s32 %v442, %v444
        %v446 = vrot.slane %v430, %v445
        %v448 = vunpack.c.l.s4 1983009808
        %v449 = vunpack.c.0.s8 %v448
        %v450 = vlaneseq
        %v451 = vshrl.u32 %v450, 7
        %v452 = vsub.s32 %v449, %v451
        %v453 = vrot.slane %v431, %v452
        %v455 = vunpack.c.l.s4 1983009808
        %v456 = vunpack.c.0.s8 %v455
        %v457 = vlaneseq
        %v458 = vshrl.u32 %v457, 7
        %v459 = vsub.s32 %v456, %v458
        %v460 = vrot.slane %v432, %v459
        %v461 = vcombine.low %v439, %v453
        %v462 = vcombine.high %v439, %v453
        %v463 = vcombine.low %v446, %v460
        %v464 = vcombine.high %v446, %v460
        %v465 = vcombine.low %v284, %v286
        %v466 = vcombine.high %v284, %v286
        %v467 = vcombine.low %v288, %v290
        %v468 = vcombine.high %v288, %v290
        %v470 = vunpack.c.l.s4 1983009808
        %v471 = vunpack.c.0.s8 %v470
        %v472 = vlaneseq
        %v473 = vshrl.u32 %v472, 7
        %v474 = vsub.s32 %v471, %v473
        %v475 = vrot.slane %v465, %v474
        %v477 = vunpack.c.l.s4 1983009808
        %v478 = vunpack.c.0.s8 %v477
        %v479 = vlaneseq
        %v480 = vshrl.u32 %v479, 7
        %v481 = vsub.s32 %v478, %v480
        %v482 = vrot.slane %v466, %v481
        %v484 = vunpack.c.l.s4 1983009808
        %v485 = vunpack.c.0.s8 %v484
        %v486 = vlaneseq
        %v487 = vshrl.u32 %v486, 7
        %v488 = vsub.s32 %v485, %v487
        %v489 = vrot.slane %v467, %v488
        %v491 = vunpack.c.l.s4 1983009808
        %v492 = vunpack.c.0.s8 %v491
        %v493 = vlaneseq
        %v494 = vshrl.u32 %v493, 7
        %v495 = vsub.s32 %v492, %v494
        %v496 = vrot.slane %v468, %v495
        %v497 = vcombine.low %v475, %v489
        %v498 = vcombine.high %v475, %v489
        %v499 = vcombine.low %v482, %v496
        %v500 = vcombine.high %v482, %v496
        %v501 = vcombine.low %v291, %v293
        %v502 = vcombine.high %v291, %v293
        %v503 = vcombine.low %v295, %v297
        %v504 = vcombine.high %v295, %v297
        %v506 = vunpack.c.l.s4 1983009808
        %v507 = vunpack.c.0.s8 %v506
        %v508 = vlaneseq
        %v509 = vshrl.u32 %v508, 7
        %v510 = vsub.s32 %v507, %v509
        %v511 = vrot.slane %v501, %v510
        %v513 = vunpack.c.l.s4 1983009808
        %v514 = vunpack.c.0.s8 %v513
        %v515 = vlaneseq
        %v516 = vshrl.u32 %v515, 7
        %v517 = vsub.s32 %v514, %v516
        %v518 = vrot.slane %v502, %v517
        %v520 = vunpack.c.l.s4 1983009808
        %v521 = vunpack.c.0.s8 %v520
        %v522 = vlaneseq
        %v523 = vshrl.u32 %v522, 7
        %v524 = vsub.s32 %v521, %v523
        %v525 = vrot.slane %v503, %v524
        %v527 = vunpack.c.l.s4 1983009808
        %v528 = vunpack.c.0.s8 %v527
        %v529 = vlaneseq
        %v530 = vshrl.u32 %v529, 7
        %v531 = vsub.s32 %v528, %v530
        %v532 = vrot.slane %v504, %v531
        %v533 = vcombine.low %v511, %v525
        %v534 = vcombine.high %v511, %v525
        %v535 = vcombine.low %v518, %v532
        %v536 = vcombine.high %v518, %v532
        %v537 = vcombine.low %v292, %v294
        %v538 = vcombine.high %v292, %v294
        %v539 = vcombine.low %v296, %v298
        %v540 = vcombine.high %v296, %v298
        %v542 = vunpack.c.l.s4 1983009808
        %v543 = vunpack.c.0.s8 %v542
        %v544 = vlaneseq
        %v545 = vshrl.u32 %v544, 7
        %v546 = vsub.s32 %v543, %v545
        %v547 = vrot.slane %v537, %v546
        %v549 = vunpack.c.l.s4 1983009808
        %v550 = vunpack.c.0.s8 %v549
        %v551 = vlaneseq
        %v552 = vshrl.u32 %v551, 7
        %v553 = vsub.s32 %v550, %v552
        %v554 = vrot.slane %v538, %v553
        %v556 = vunpack.c.l.s4 1983009808
        %v557 = vunpack.c.0.s8 %v556
        %v558 = vlaneseq
        %v559 = vshrl.u32 %v558, 7
        %v560 = vsub.s32 %v557, %v559
        %v561 = vrot.slane %v539, %v560
        %v563 = vunpack.c.l.s4 1983009808
        %v564 = vunpack.c.0.s8 %v563
        %v565 = vlaneseq
        %v566 = vshrl.u32 %v565, 7
        %v567 = vsub.s32 %v564, %v566
        %v568 = vrot.slane %v540, %v567
        %v569 = vcombine.low %v547, %v561
        %v570 = vcombine.high %v547, %v561
        %v571 = vcombine.low %v554, %v568
        %v572 = vcombine.high %v554, %v568
        %v573 = vcombine.low %v299, %v301
        %v574 = vcombine.high %v299, %v301
        %v575 = vcombine.low %v303, %v305
        %v576 = vcombine.high %v303, %v305
        %v578 = vunpack.c.l.s4 1983009808
        %v579 = vunpack.c.0.s8 %v578
        %v580 = vlaneseq
        %v581 = vshrl.u32 %v580, 7
        %v582 = vsub.s32 %v579, %v581
        %v583 = vrot.slane %v573, %v582
        %v585 = vunpack.c.l.s4 1983009808
        %v586 = vunpack.c.0.s8 %v585
        %v587 = vlaneseq
        %v588 = vshrl.u32 %v587, 7
        %v589 = vsub.s32 %v586, %v588
        %v590 = vrot.slane %v574, %v589
        %v592 = vunpack.c.l.s4 1983009808
        %v593 = vunpack.c.0.s8 %v592
        %v594 = vlaneseq
        %v595 = vshrl.u32 %v594, 7
        %v596 = vsub.s32 %v593, %v595
        %v597 = vrot.slane %v575, %v596
        %v599 = vunpack.c.l.s4 1983009808
        %v600 = vunpack.c.0.s8 %v599
        %v601 = vlaneseq
        %v602 = vshrl.u32 %v601, 7
        %v603 = vsub.s32 %v600, %v602
        %v604 = vrot.slane %v576, %v603
        %v605 = vcombine.low %v583, %v597
        %v606 = vcombine.high %v583, %v597
        %v607 = vcombine.low %v590, %v604
        %v608 = vcombine.high %v590, %v604
        %v609 = vcombine.low %v300, %v302
        %v610 = vcombine.high %v300, %v302
        %v611 = vcombine.low %v304, %v306
        %v612 = vcombine.high %v304, %v306
        %v614 = vunpack.c.l.s4 1983009808
        %v615 = vunpack.c.0.s8 %v614
        %v616 = vlaneseq
        %v617 = vshrl.u32 %v616, 7
        %v618 = vsub.s32 %v615, %v617
        %v619 = vrot.slane %v609, %v618
        %v621 = vunpack.c.l.s4 1983009808
        %v622 = vunpack.c.0.s8 %v621
        %v623 = vlaneseq
        %v624 = vshrl.u32 %v623, 7
        %v625 = vsub.s32 %v622, %v624
        %v626 = vrot.slane %v610, %v625
        %v628 = vunpack.c.l.s4 1983009808
        %v629 = vunpack.c.0.s8 %v628
        %v630 = vlaneseq
        %v631 = vshrl.u32 %v630, 7
        %v632 = vsub.s32 %v629, %v631
        %v633 = vrot.slane %v611, %v632
        %v635 = vunpack.c.l.s4 1983009808
        %v636 = vunpack.c.0.s8 %v635
        %v637 = vlaneseq
        %v638 = vshrl.u32 %v637, 7
        %v639 = vsub.s32 %v636, %v638
        %v640 = vrot.slane %v612, %v639
        %v641 = vcombine.low %v619, %v633
        %v642 = vcombine.high %v619, %v633
        %v643 = vcombine.low %v626, %v640
        %v644 = vcombine.high %v626, %v640
        %v677 = vsel %vm321, %v389, inf
        %v678 = vsel %vm321, %v390, inf
        %v679 = vsel %vm321, %v391, inf
        %v680 = vsel %vm321, %v392, inf
        %v681 = vsel %vm321, %v425, inf
        %v682 = vsel %vm321, %v426, inf
        %v683 = vsel %vm321, %v427, inf
        %v684 = vsel %vm321, %v428, inf
        %v685 = vsel %vm322, %v461, inf
        %v686 = vsel %vm322, %v462, inf
        %v687 = vsel %vm322, %v463, inf
        %v688 = vsel %vm322, %v464, inf
        %v689 = vsel %vm322, %v497, inf
        %v690 = vsel %vm322, %v498, inf
        %v691 = vsel %vm322, %v499, inf
        %v692 = vsel %vm322, %v500, inf
        %v693 = vsel %vm323, %v533, inf
        %v694 = vsel %vm323, %v534, inf
        %v695 = vsel %vm323, %v535, inf
        %v696 = vsel %vm323, %v536, inf
        %v697 = vsel %vm323, %v569, inf
        %v698 = vsel %vm323, %v570, inf
        %v699 = vsel %vm323, %v571, inf
        %v700 = vsel %vm323, %v572, inf
        %v701 = vsel %vm324, %v605, inf
        %v702 = vsel %vm324, %v606, inf
        %v703 = vsel %vm324, %v607, inf
        %v704 = vsel %vm324, %v608, inf
        %v705 = vsel %vm324, %v641, inf
        %v706 = vsel %vm324, %v642, inf
        %v707 = vsel %vm324, %v643, inf
        %v708 = vsel %vm324, %v644, inf
        %v709 = vsel %vm321, %v389, -inf
        %v710 = vsel %vm321, %v390, -inf
        %v711 = vsel %vm321, %v391, -inf
        %v712 = vsel %vm321, %v392, -inf
        %v713 = vsel %vm321, %v425, -inf
        %v714 = vsel %vm321, %v426, -inf
        %v715 = vsel %vm321, %v427, -inf
        %v716 = vsel %vm321, %v428, -inf
        %v717 = vsel %vm322, %v461, -inf
        %v718 = vsel %vm322, %v462, -inf
        %v719 = vsel %vm322, %v463, -inf
        %v720 = vsel %vm322, %v464, -inf
        %v721 = vsel %vm322, %v497, -inf
        %v722 = vsel %vm322, %v498, -inf
        %v723 = vsel %vm322, %v499, -inf
        %v724 = vsel %vm322, %v500, -inf
        %v725 = vsel %vm323, %v533, -inf
        %v726 = vsel %vm323, %v534, -inf
        %v727 = vsel %vm323, %v535, -inf
        %v728 = vsel %vm323, %v536, -inf
        %v729 = vsel %vm323, %v569, -inf
        %v730 = vsel %vm323, %v570, -inf
        %v731 = vsel %vm323, %v571, -inf
        %v732 = vsel %vm323, %v572, -inf
        %v733 = vsel %vm324, %v605, -inf
        %v734 = vsel %vm324, %v606, -inf
        %v735 = vsel %vm324, %v607, -inf
        %v736 = vsel %vm324, %v608, -inf
        %v737 = vsel %vm324, %v641, -inf
        %v738 = vsel %vm324, %v642, -inf
        %v739 = vsel %vm324, %v643, -inf
        %v740 = vsel %vm324, %v644, -inf
        %v741 = vld [vmem:[#allocation2] sm:$0xff]
        %v742 = vld [vmem:[#allocation2 + $0x8] sm:$0xff]
        %v743 = vld [vmem:[#allocation2 + $0x10] sm:$0xff]
        %v744 = vld [vmem:[#allocation2 + $0x18] sm:$0xff]
        %v745 = vld [vmem:[#allocation2 + $0x20] sm:$0xff]
        %v746 = vld [vmem:[#allocation2 + $0x28] sm:$0xff]
        %v747 = vld [vmem:[#allocation2 + $0x30] sm:$0xff]
        %v748 = vld [vmem:[#allocation2 + $0x38] sm:$0xff]
        %v749 = vld [vmem:[#allocation2 + $0x40] sm:$0xff]
        %v750 = vld [vmem:[#allocation2 + $0x48] sm:$0xff]
        %v751 = vld [vmem:[#allocation2 + $0x50] sm:$0xff]
        %v752 = vld [vmem:[#allocation2 + $0x58] sm:$0xff]
        %v753 = vld [vmem:[#allocation2 + $0x60] sm:$0xff]
        %v754 = vld [vmem:[#allocation2 + $0x68] sm:$0xff]
        %v755 = vld [vmem:[#allocation2 + $0x70] sm:$0xff]
        %v756 = vld [vmem:[#allocation2 + $0x78] sm:$0xff]
        %v757 = vld [vmem:[#allocation2 + $0x80] sm:$0xff]
        %v758 = vld [vmem:[#allocation2 + $0x88] sm:$0xff]
        %v759 = vld [vmem:[#allocation2 + $0x90] sm:$0xff]
        %v760 = vld [vmem:[#allocation2 + $0x98] sm:$0xff]
        %v761 = vld [vmem:[#allocation2 + $0xa0] sm:$0xff]
        %v762 = vld [vmem:[#allocation2 + $0xa8] sm:$0xff]
        %v763 = vld [vmem:[#allocation2 + $0xb0] sm:$0xff]
        %v764 = vld [vmem:[#allocation2 + $0xb8] sm:$0xff]
        %v765 = vld [vmem:[#allocation2 + $0xc0] sm:$0xff]
        %v766 = vld [vmem:[#allocation2 + $0xc8] sm:$0xff]
        %v767 = vld [vmem:[#allocation2 + $0xd0] sm:$0xff]
        %v768 = vld [vmem:[#allocation2 + $0xd8] sm:$0xff]
        %v769 = vld [vmem:[#allocation2 + $0xe0] sm:$0xff]
        %v770 = vld [vmem:[#allocation2 + $0xe8] sm:$0xff]
        %v771 = vld [vmem:[#allocation2 + $0xf0] sm:$0xff]
        %v772 = vld [vmem:[#allocation2 + $0xf8] sm:$0xff]
        %v773 = vmin.f32 %v741, %v677
        %v774 = vmin.f32 %v742, %v678
        %v775 = vmin.f32 %v743, %v679
        %v776 = vmin.f32 %v744, %v680
        %v777 = vmin.f32 %v745, %v681
        %v778 = vmin.f32 %v746, %v682
        %v779 = vmin.f32 %v747, %v683
        %v780 = vmin.f32 %v748, %v684
        %v781 = vmin.f32 %v749, %v685
        %v782 = vmin.f32 %v750, %v686
        %v783 = vmin.f32 %v751, %v687
        %v784 = vmin.f32 %v752, %v688
        %v785 = vmin.f32 %v753, %v689
        %v786 = vmin.f32 %v754, %v690
        %v787 = vmin.f32 %v755, %v691
        %v788 = vmin.f32 %v756, %v692
        %v789 = vmin.f32 %v757, %v693
        %v790 = vmin.f32 %v758, %v694
        %v791 = vmin.f32 %v759, %v695
        %v792 = vmin.f32 %v760, %v696
        %v793 = vmin.f32 %v761, %v697
        %v794 = vmin.f32 %v762, %v698
        %v795 = vmin.f32 %v763, %v699
        %v796 = vmin.f32 %v764, %v700
        %v797 = vmin.f32 %v765, %v701
        %v798 = vmin.f32 %v766, %v702
        %v799 = vmin.f32 %v767, %v703
        %v800 = vmin.f32 %v768, %v704
        %v801 = vmin.f32 %v769, %v705
        %v802 = vmin.f32 %v770, %v706
        %v803 = vmin.f32 %v771, %v707
        %v804 = vmin.f32 %v772, %v708
        %805 = vst [vmem:[#allocation2] sm:$0xff] %v773
        %806 = vst [vmem:[#allocation2 + $0x8] sm:$0xff] %v774
        %807 = vst [vmem:[#allocation2 + $0x10] sm:$0xff] %v775
        %808 = vst [vmem:[#allocation2 + $0x18] sm:$0xff] %v776
        %809 = vst [vmem:[#allocation2 + $0x20] sm:$0xff] %v777
        %810 = vst [vmem:[#allocation2 + $0x28] sm:$0xff] %v778
        %811 = vst [vmem:[#allocation2 + $0x30] sm:$0xff] %v779
        %812 = vst [vmem:[#allocation2 + $0x38] sm:$0xff] %v780
        %813 = vst [vmem:[#allocation2 + $0x40] sm:$0xff] %v781
        %814 = vst [vmem:[#allocation2 + $0x48] sm:$0xff] %v782
        %815 = vst [vmem:[#allocation2 + $0x50] sm:$0xff] %v783
        %816 = vst [vmem:[#allocation2 + $0x58] sm:$0xff] %v784
        %817 = vst [vmem:[#allocation2 + $0x60] sm:$0xff] %v785
        %818 = vst [vmem:[#allocation2 + $0x68] sm:$0xff] %v786
        %819 = vst [vmem:[#allocation2 + $0x70] sm:$0xff] %v787
        %820 = vst [vmem:[#allocation2 + $0x78] sm:$0xff] %v788
        %821 = vst [vmem:[#allocation2 + $0x80] sm:$0xff] %v789
        %822 = vst [vmem:[#allocation2 + $0x88] sm:$0xff] %v790
        %823 = vst [vmem:[#allocation2 + $0x90] sm:$0xff] %v791
        %824 = vst [vmem:[#allocation2 + $0x98] sm:$0xff] %v792
        %825 = vst [vmem:[#allocation2 + $0xa0] sm:$0xff] %v793
        %826 = vst [vmem:[#allocation2 + $0xa8] sm:$0xff] %v794
        %827 = vst [vmem:[#allocation2 + $0xb0] sm:$0xff] %v795
        %828 = vst [vmem:[#allocation2 + $0xb8] sm:$0xff] %v796
        %829 = vst [vmem:[#allocation2 + $0xc0] sm:$0xff] %v797
        %830 = vst [vmem:[#allocation2 + $0xc8] sm:$0xff] %v798
        %831 = vst [vmem:[#allocation2 + $0xd0] sm:$0xff] %v799
        %832 = vst [vmem:[#allocation2 + $0xd8] sm:$0xff] %v800
        %833 = vst [vmem:[#allocation2 + $0xe0] sm:$0xff] %v801
        %834 = vst [vmem:[#allocation2 + $0xe8] sm:$0xff] %v802
        %835 = vst [vmem:[#allocation2 + $0xf0] sm:$0xff] %v803
        %836 = vst [vmem:[#allocation2 + $0xf8] sm:$0xff] %v804
        %v837 = vld [vmem:[#allocation3] sm:$0xff]
        %v838 = vld [vmem:[#allocation3 + $0x8] sm:$0xff]
        %v839 = vld [vmem:[#allocation3 + $0x10] sm:$0xff]
        %v840 = vld [vmem:[#allocation3 + $0x18] sm:$0xff]
        %v841 = vld [vmem:[#allocation3 + $0x20] sm:$0xff]
        %v842 = vld [vmem:[#allocation3 + $0x28] sm:$0xff]
        %v843 = vld [vmem:[#allocation3 + $0x30] sm:$0xff]
        %v844 = vld [vmem:[#allocation3 + $0x38] sm:$0xff]
        %v845 = vld [vmem:[#allocation3 + $0x40] sm:$0xff]
        %v846 = vld [vmem:[#allocation3 + $0x48] sm:$0xff]
        %v847 = vld [vmem:[#allocation3 + $0x50] sm:$0xff]
        %v848 = vld [vmem:[#allocation3 + $0x58] sm:$0xff]
        %v849 = vld [vmem:[#allocation3 + $0x60] sm:$0xff]
        %v850 = vld [vmem:[#allocation3 + $0x68] sm:$0xff]
        %v851 = vld [vmem:[#allocation3 + $0x70] sm:$0xff]
        %v852 = vld [vmem:[#allocation3 + $0x78] sm:$0xff]
        %v853 = vld [vmem:[#allocation3 + $0x80] sm:$0xff]
        %v854 = vld [vmem:[#allocation3 + $0x88] sm:$0xff]
        %v855 = vld [vmem:[#allocation3 + $0x90] sm:$0xff]
        %v856 = vld [vmem:[#allocation3 + $0x98] sm:$0xff]
        %v857 = vld [vmem:[#allocation3 + $0xa0] sm:$0xff]
        %v858 = vld [vmem:[#allocation3 + $0xa8] sm:$0xff]
        %v859 = vld [vmem:[#allocation3 + $0xb0] sm:$0xff]
        %v860 = vld [vmem:[#allocation3 + $0xb8] sm:$0xff]
        %v861 = vld [vmem:[#allocation3 + $0xc0] sm:$0xff]
        %v862 = vld [vmem:[#allocation3 + $0xc8] sm:$0xff]
        %v863 = vld [vmem:[#allocation3 + $0xd0] sm:$0xff]
        %v864 = vld [vmem:[#allocation3 + $0xd8] sm:$0xff]
        %v865 = vld [vmem:[#allocation3 + $0xe0] sm:$0xff]
        %v866 = vld [vmem:[#allocation3 + $0xe8] sm:$0xff]
        %v867 = vld [vmem:[#allocation3 + $0xf0] sm:$0xff]
        %v868 = vld [vmem:[#allocation3 + $0xf8] sm:$0xff]
        %v869 = vmax.f32 %v837, %v709
        %v870 = vmax.f32 %v838, %v710
        %v871 = vmax.f32 %v839, %v711
        %v872 = vmax.f32 %v840, %v712
        %v873 = vmax.f32 %v841, %v713
        %v874 = vmax.f32 %v842, %v714
        %v875 = vmax.f32 %v843, %v715
        %v876 = vmax.f32 %v844, %v716
        %v877 = vmax.f32 %v845, %v717
        %v878 = vmax.f32 %v846, %v718
        %v879 = vmax.f32 %v847, %v719
        %v880 = vmax.f32 %v848, %v720
        %v881 = vmax.f32 %v849, %v721
        %v882 = vmax.f32 %v850, %v722
        %v883 = vmax.f32 %v851, %v723
        %v884 = vmax.f32 %v852, %v724
        %v885 = vmax.f32 %v853, %v725
        %v886 = vmax.f32 %v854, %v726
        %v887 = vmax.f32 %v855, %v727
        %v888 = vmax.f32 %v856, %v728
        %v889 = vmax.f32 %v857, %v729
        %v890 = vmax.f32 %v858, %v730
        %v891 = vmax.f32 %v859, %v731
        %v892 = vmax.f32 %v860, %v732
        %v893 = vmax.f32 %v861, %v733
        %v894 = vmax.f32 %v862, %v734
        %v895 = vmax.f32 %v863, %v735
        %v896 = vmax.f32 %v864, %v736
        %v897 = vmax.f32 %v865, %v737
        %v898 = vmax.f32 %v866, %v738
        %v899 = vmax.f32 %v867, %v739
        %v900 = vmax.f32 %v868, %v740
        %901 = vst [vmem:[#allocation3] sm:$0xff] %v869
        %902 = vst [vmem:[#allocation3 + $0x8] sm:$0xff] %v870
        %903 = vst [vmem:[#allocation3 + $0x10] sm:$0xff] %v871
        %904 = vst [vmem:[#allocation3 + $0x18] sm:$0xff] %v872
        %905 = vst [vmem:[#allocation3 + $0x20] sm:$0xff] %v873
        %906 = vst [vmem:[#allocation3 + $0x28] sm:$0xff] %v874
        %907 = vst [vmem:[#allocation3 + $0x30] sm:$0xff] %v875
        %908 = vst [vmem:[#allocation3 + $0x38] sm:$0xff] %v876
        %909 = vst [vmem:[#allocation3 + $0x40] sm:$0xff] %v877
        %910 = vst [vmem:[#allocation3 + $0x48] sm:$0xff] %v878
        %911 = vst [vmem:[#allocation3 + $0x50] sm:$0xff] %v879
        %912 = vst [vmem:[#allocation3 + $0x58] sm:$0xff] %v880
        %913 = vst [vmem:[#allocation3 + $0x60] sm:$0xff] %v881
        %914 = vst [vmem:[#allocation3 + $0x68] sm:$0xff] %v882
        %915 = vst [vmem:[#allocation3 + $0x70] sm:$0xff] %v883
        %916 = vst [vmem:[#allocation3 + $0x78] sm:$0xff] %v884
        %917 = vst [vmem:[#allocation3 + $0x80] sm:$0xff] %v885
        %918 = vst [vmem:[#allocation3 + $0x88] sm:$0xff] %v886
        %919 = vst [vmem:[#allocation3 + $0x90] sm:$0xff] %v887
        %920 = vst [vmem:[#allocation3 + $0x98] sm:$0xff] %v888
        %921 = vst [vmem:[#allocation3 + $0xa0] sm:$0xff] %v889
        %922 = vst [vmem:[#allocation3 + $0xa8] sm:$0xff] %v890
        %923 = vst [vmem:[#allocation3 + $0xb0] sm:$0xff] %v891
        %924 = vst [vmem:[#allocation3 + $0xb8] sm:$0xff] %v892
        %925 = vst [vmem:[#allocation3 + $0xc0] sm:$0xff] %v893
        %926 = vst [vmem:[#allocation3 + $0xc8] sm:$0xff] %v894
        %927 = vst [vmem:[#allocation3 + $0xd0] sm:$0xff] %v895
        %928 = vst [vmem:[#allocation3 + $0xd8] sm:$0xff] %v896
        %929 = vst [vmem:[#allocation3 + $0xe0] sm:$0xff] %v897
        %930 = vst [vmem:[#allocation3 + $0xe8] sm:$0xff] %v898
        %931 = vst [vmem:[#allocation3 + $0xf0] sm:$0xff] %v899
        %932 = vst [vmem:[#allocation3 + $0xf8] sm:$0xff] %v900
        // Predicated region
        $region33: #{tpu_custom_call.1} parent=23 // pred_check
          %p933 = pneg %p207
        $region34: #{tpu_custom_call.1} parent=23 // pred_check_branch
          %935 = sbr.rel (%p933) target = $region36
        $region35: #{tpu_custom_call.1} parent=23 // pred_region
          %v936 = vld [vmem:[#allocation2] sm:$0xff]
          %v937 = vld [vmem:[#allocation2 + $0x8] sm:$0xff]
          %v938 = vld [vmem:[#allocation2 + $0x10] sm:$0xff]
          %v939 = vld [vmem:[#allocation2 + $0x18] sm:$0xff]
          %v940 = vld [vmem:[#allocation2 + $0x20] sm:$0xff]
          %v941 = vld [vmem:[#allocation2 + $0x28] sm:$0xff]
          %v942 = vld [vmem:[#allocation2 + $0x30] sm:$0xff]
          %v943 = vld [vmem:[#allocation2 + $0x38] sm:$0xff]
          %v944 = vld [vmem:[#allocation2 + $0x40] sm:$0xff]
          %v945 = vld [vmem:[#allocation2 + $0x48] sm:$0xff]
          %v946 = vld [vmem:[#allocation2 + $0x50] sm:$0xff]
          %v947 = vld [vmem:[#allocation2 + $0x58] sm:$0xff]
          %v948 = vld [vmem:[#allocation2 + $0x60] sm:$0xff]
          %v949 = vld [vmem:[#allocation2 + $0x68] sm:$0xff]
          %v950 = vld [vmem:[#allocation2 + $0x70] sm:$0xff]
          %v951 = vld [vmem:[#allocation2 + $0x78] sm:$0xff]
          %v952 = vld [vmem:[#allocation2 + $0x80] sm:$0xff]
          %v953 = vld [vmem:[#allocation2 + $0x88] sm:$0xff]
          %v954 = vld [vmem:[#allocation2 + $0x90] sm:$0xff]
          %v955 = vld [vmem:[#allocation2 + $0x98] sm:$0xff]
          %v956 = vld [vmem:[#allocation2 + $0xa0] sm:$0xff]
          %v957 = vld [vmem:[#allocation2 + $0xa8] sm:$0xff]
          %v958 = vld [vmem:[#allocation2 + $0xb0] sm:$0xff]
          %v959 = vld [vmem:[#allocation2 + $0xb8] sm:$0xff]
          %v960 = vld [vmem:[#allocation2 + $0xc0] sm:$0xff]
          %v961 = vld [vmem:[#allocation2 + $0xc8] sm:$0xff]
          %v962 = vld [vmem:[#allocation2 + $0xd0] sm:$0xff]
          %v963 = vld [vmem:[#allocation2 + $0xd8] sm:$0xff]
          %v964 = vld [vmem:[#allocation2 + $0xe0] sm:$0xff]
          %v965 = vld [vmem:[#allocation2 + $0xe8] sm:$0xff]
          %v966 = vld [vmem:[#allocation2 + $0xf0] sm:$0xff]
          %v967 = vld [vmem:[#allocation2 + $0xf8] sm:$0xff]
          %v968 = vmin.f32 %v936, %v940
          %v969 = vmin.f32 %v937, %v941
          %v970 = vmin.f32 %v938, %v942
          %v971 = vmin.f32 %v939, %v943
          %v972 = vmin.f32 %v968, %v944
          %v973 = vmin.f32 %v969, %v945
          %v974 = vmin.f32 %v970, %v946
          %v975 = vmin.f32 %v971, %v947
          %v976 = vmin.f32 %v972, %v948
          %v977 = vmin.f32 %v973, %v949
          %v978 = vmin.f32 %v974, %v950
          %v979 = vmin.f32 %v975, %v951
          %v980 = vmin.f32 %v976, %v952
          %v981 = vmin.f32 %v977, %v953
          %v982 = vmin.f32 %v978, %v954
          %v983 = vmin.f32 %v979, %v955
          %v984 = vmin.f32 %v980, %v956
          %v985 = vmin.f32 %v981, %v957
          %v986 = vmin.f32 %v982, %v958
          %v987 = vmin.f32 %v983, %v959
          %v988 = vmin.f32 %v984, %v960
          %v989 = vmin.f32 %v985, %v961
          %v990 = vmin.f32 %v986, %v962
          %v991 = vmin.f32 %v987, %v963
          %v992 = vmin.f32 %v988, %v964
          %v993 = vmin.f32 %v989, %v965
          %v994 = vmin.f32 %v990, %v966
          %v995 = vmin.f32 %v991, %v967
          %v996 = vmin.f32 %v992, %v993
          %v997 = vmin.f32 %v994, %v995
          %v998 = vmin.f32 %v996, %v997
          %999 = vmin.xlane.f32.xlu0 %v998
          %v1000 = vpop.xlane.xlu0 %999
          %v1001 = vrot.slane %v1000, 4
          %v1002 = vmin.f32 %v1000, %v1001
          %v1003 = vrot.slane %v1002, 2
          %v1004 = vmin.f32 %v1002, %v1003
          %v1005 = vrot.slane %v1004, 1
          %v1006 = vmin.f32 %v1004, %v1005
          %s1007 = vtos %v1006
          %v1008 = vstv %s1007
          %1009 = vst [vmem:[%s192] sm:$0xff] %v1008
          %v1010 = vld [vmem:[#allocation3] sm:$0xff]
          %v1011 = vld [vmem:[#allocation3 + $0x8] sm:$0xff]
          %v1012 = vld [vmem:[#allocation3 + $0x10] sm:$0xff]
          %v1013 = vld [vmem:[#allocation3 + $0x18] sm:$0xff]
          %v1014 = vld [vmem:[#allocation3 + $0x20] sm:$0xff]
          %v1015 = vld [vmem:[#allocation3 + $0x28] sm:$0xff]
          %v1016 = vld [vmem:[#allocation3 + $0x30] sm:$0xff]
          %v1017 = vld [vmem:[#allocation3 + $0x38] sm:$0xff]
          %v1018 = vld [vmem:[#allocation3 + $0x40] sm:$0xff]
          %v1019 = vld [vmem:[#allocation3 + $0x48] sm:$0xff]
          %v1020 = vld [vmem:[#allocation3 + $0x50] sm:$0xff]
          %v1021 = vld [vmem:[#allocation3 + $0x58] sm:$0xff]
          %v1022 = vld [vmem:[#allocation3 + $0x60] sm:$0xff]
          %v1023 = vld [vmem:[#allocation3 + $0x68] sm:$0xff]
          %v1024 = vld [vmem:[#allocation3 + $0x70] sm:$0xff]
          %v1025 = vld [vmem:[#allocation3 + $0x78] sm:$0xff]
          %v1026 = vld [vmem:[#allocation3 + $0x80] sm:$0xff]
          %v1027 = vld [vmem:[#allocation3 + $0x88] sm:$0xff]
          %v1028 = vld [vmem:[#allocation3 + $0x90] sm:$0xff]
          %v1029 = vld [vmem:[#allocation3 + $0x98] sm:$0xff]
          %v1030 = vld [vmem:[#allocation3 + $0xa0] sm:$0xff]
          %v1031 = vld [vmem:[#allocation3 + $0xa8] sm:$0xff]
          %v1032 = vld [vmem:[#allocation3 + $0xb0] sm:$0xff]
          %v1033 = vld [vmem:[#allocation3 + $0xb8] sm:$0xff]
          %v1034 = vld [vmem:[#allocation3 + $0xc0] sm:$0xff]
          %v1035 = vld [vmem:[#allocation3 + $0xc8] sm:$0xff]
          %v1036 = vld [vmem:[#allocation3 + $0xd0] sm:$0xff]
          %v1037 = vld [vmem:[#allocation3 + $0xd8] sm:$0xff]
          %v1038 = vld [vmem:[#allocation3 + $0xe0] sm:$0xff]
          %v1039 = vld [vmem:[#allocation3 + $0xe8] sm:$0xff]
          %v1040 = vld [vmem:[#allocation3 + $0xf0] sm:$0xff]
          %v1041 = vld [vmem:[#allocation3 + $0xf8] sm:$0xff]
          %v1042 = vmax.f32 %v1010, %v1014
          %v1043 = vmax.f32 %v1011, %v1015
          %v1044 = vmax.f32 %v1012, %v1016
          %v1045 = vmax.f32 %v1013, %v1017
          %v1046 = vmax.f32 %v1042, %v1018
          %v1047 = vmax.f32 %v1043, %v1019
          %v1048 = vmax.f32 %v1044, %v1020
          %v1049 = vmax.f32 %v1045, %v1021
          %v1050 = vmax.f32 %v1046, %v1022
          %v1051 = vmax.f32 %v1047, %v1023
          %v1052 = vmax.f32 %v1048, %v1024
          %v1053 = vmax.f32 %v1049, %v1025
          %v1054 = vmax.f32 %v1050, %v1026
          %v1055 = vmax.f32 %v1051, %v1027
          %v1056 = vmax.f32 %v1052, %v1028
          %v1057 = vmax.f32 %v1053, %v1029
          %v1058 = vmax.f32 %v1054, %v1030
          %v1059 = vmax.f32 %v1055, %v1031
          %v1060 = vmax.f32 %v1056, %v1032
          %v1061 = vmax.f32 %v1057, %v1033
          %v1062 = vmax.f32 %v1058, %v1034
          %v1063 = vmax.f32 %v1059, %v1035
          %v1064 = vmax.f32 %v1060, %v1036
          %v1065 = vmax.f32 %v1061, %v1037
          %v1066 = vmax.f32 %v1062, %v1038
          %v1067 = vmax.f32 %v1063, %v1039
          %v1068 = vmax.f32 %v1064, %v1040
          %v1069 = vmax.f32 %v1065, %v1041
          %v1070 = vmax.f32 %v1066, %v1067
          %v1071 = vmax.f32 %v1068, %v1069
          %v1072 = vmax.f32 %v1070, %v1071
          %1073 = vmax.xlane.f32.xlu0 %v1072
          %v1074 = vpop.xlane.xlu0 %1073
          %v1075 = vrot.slane %v1074, 4
          %v1076 = vmax.f32 %v1074, %v1075
          %v1077 = vrot.slane %v1076, 2
          %v1078 = vmax.f32 %v1076, %v1077
          %v1079 = vrot.slane %v1078, 1
          %v1080 = vmax.f32 %v1078, %v1079
          %s1081 = vtos %v1080
          %v1082 = vstv %s1081
          %1083 = vst [vmem:[%s199] sm:$0xff] %v1082
        $region36: #{tpu_custom_call.1} parent=23 // pred_fallthru
          _
        %s1084 = sand.u32 %s75, 1
        %s1085 = scalar_lea.sflag [#allocation6], %s1084
        %s1086 = sand.u32 %s75, 1
        %s1087 = smul.addr %s1086, 8
        %s1088 = scalar_lea.vmem [#allocation7], %s1087
        %s1089 = sand.u32 %s101, 1
        %s1090 = scalar_lea.sflag [#allocation9], %s1089
        %s1091 = sand.u32 %s101, 1
        %s1092 = smul.addr %s1091, 8
        %s1093 = scalar_lea.vmem [#allocation8], %s1092
        // Predicated region
        $region37: #{tpu_custom_call.1} parent=23 // pred_check
          %p1094 = pneg %p85
        $region38: #{tpu_custom_call.1} parent=23 // pred_check_branch
          %1096 = sbr.rel (%p1094) target = $region40
        $region39: #{tpu_custom_call.1} parent=23 // pred_region
          %s1098 = ssub.s32 128, 128
          %1099 = vsyncadd %s1085, %s1098
          %s1100 = smul.addr %s27, 128
          %s1101 = scalar_lea.hbm %s1, %s1100
          %s1103 = sshll.u32 %s1088, 4
          %s1104 = int_to_ptr.vmem [resolvable:$true] %s1103
          %1106 = dma.vmem_to_hbm [thread:$0]  %s1104, 128, %s1101, %s1085
        $region40: #{tpu_custom_call.1} parent=23 // pred_fallthru
          _
        // Predicated region
        $region41: #{tpu_custom_call.1} parent=23 // pred_check
          %p1107 = pneg %p111
        $region42: #{tpu_custom_call.1} parent=23 // pred_check_branch
          %1109 = sbr.rel (%p1107) target = $region44
        $region43: #{tpu_custom_call.1} parent=23 // pred_region
          %s1111 = ssub.s32 128, 128
          %1112 = vsyncadd %s1090, %s1111
          %s1113 = smul.addr %s27, 128
          %s1114 = scalar_lea.hbm %s2, %s1113
          %s1116 = sshll.u32 %s1093, 4
          %s1117 = int_to_ptr.vmem [resolvable:$true] %s1116
          %1119 = dma.vmem_to_hbm [thread:$0]  %s1117, 128, %s1114, %s1090
        $region44: #{tpu_custom_call.1} parent=23 // pred_fallthru
          _
      $region24: #{tpu_custom_call.1} parent=5 // pred_fallthru
        _
      %p1120 = scmp.le.s32.totalorder 2, %s18
      // Predicated region
      $region45: #{tpu_custom_call.1} parent=5 // pred_check
        %p1121 = pneg %p1120
      $region46: #{tpu_custom_call.1} parent=5 // pred_check_branch
        %1123 = sbr.rel (%p1121) target = $region48
      $region47: #{tpu_custom_call.1} parent=5 // pred_region
        %s1124 = ssub.s32 %s18, 2
        // Predicated region
        $region49: #{tpu_custom_call.1} parent=47 // pred_check
          %p1125 = pneg %p91
        $region50: #{tpu_custom_call.1} parent=47 // pred_check_branch
          %1127 = sbr.rel (%p1125) target = $region52
        $region51: #{tpu_custom_call.1} parent=47 // pred_region
          %s1128 = sand.u32 %s76, 1
          %s1129 = scalar_lea.sflag [#allocation6], %s1128
          %s1130 = sand.u32 %s76, 1
          %s1131 = smul.addr %s1130, 8
          %s1132 = scalar_lea.vmem [#allocation7], %s1131
          %1133 = dma.done %s1129, 128
        $region52: #{tpu_custom_call.1} parent=47 // pred_fallthru
          _
        // Predicated region
        $region53: #{tpu_custom_call.1} parent=47 // pred_check
          %p1134 = pneg %p117
        $region54: #{tpu_custom_call.1} parent=47 // pred_check_branch
          %1136 = sbr.rel (%p1134) target = $region56
        $region55: #{tpu_custom_call.1} parent=47 // pred_region
          %s1137 = sand.u32 %s102, 1
          %s1138 = scalar_lea.sflag [#allocation9], %s1137
          %s1139 = sand.u32 %s102, 1
          %s1140 = smul.addr %s1139, 8
          %s1141 = scalar_lea.vmem [#allocation8], %s1140
          %1142 = dma.done %s1138, 128
        $region56: #{tpu_custom_call.1} parent=47 // pred_fallthru
          _
      $region48: #{tpu_custom_call.1} parent=5 // pred_fallthru
        _
    $region6: #{tpu_custom_call.1} parent=1 // loop_footer
      %s22 = sadd.s32 1, %s18
    $region7: #{tpu_custom_call.1} parent=1 // loop_footer_branch
      %17 = sbr.rel target = $region3
    $region8: #{tpu_custom_call.1} parent=1 // loop_exit
      _
    %1143 = vsyncpa [#allocation5], 1
    %s1144 = scalar_lea.sflag [#allocation5], 1
    %1145 = vsyncpa %s1144, 1
    %1146 = vsyncpa [#allocation6], 1
    %s1147 = scalar_lea.sflag [#allocation6], 1
    %1148 = vsyncpa %s1147, 1
    %1149 = vsyncpa [#allocation9], 1
    %s1150 = scalar_lea.sflag [#allocation9], 1
    %1151 = vsyncpa %s1150, 1

</llo_original>
